<compile_context>
chip_gen: v6e
topology: v6e:2x2x1
jax: 0.10.0
libtpu: 0.0.40
codegen_flags: <defaults>
</compile_context>

<pallas_src>
import math

import jax
import jax.numpy as jnp
from jax.experimental import pallas as pl
from jax.experimental.pallas import tpu as pltpu

EPS = 1e-5
VEC_ROWS = 16  # packed bias/BN-affine rows (10 used, padded to a sublane tile)


def _round_up(n, m):
    return ((n + m - 1) // m) * m


# ---------------------------------------------------------------------------
# Parameter packing: natural (PyTorch-layout) params -> lane-dense packed form
# ---------------------------------------------------------------------------
def pack_params(p, D, H):
    """Pack all 25 parameters into one f32 vector array + one bf16 weight slab.

    Layout (all offsets 128-lane aligned):
      w_slab (2*dhp, 3*dhp + 2*2*dhp + outp) bf16, column blocks:
        [ w1 | wa1 | wb1 | wa_fused | wb_fused(block-diag) | w_out(block-diag) ]
      vec (16, 2*dhp) f32, rows:
        0..4: b1, ba1, bb1, g1, be1           (trunk, cols [0:dh])
        5..8: ba_f, bb_f, g_f, be_f           (heads, branch 2 at cols [dhp:])
        9   : b_out = [bm | bc]               (cols [0:H+Hc])
    """
    dh = 5 * D
    Hc = (H * H - H) // 2
    dhp = _round_up(dh, 128)
    tdhp = 2 * dhp
    outp = _round_up(H + Hc, 128)

    def pad_to(w, rows, cols):
        out = jnp.zeros((rows, cols), jnp.float32)
        return out.at[: w.shape[0], : w.shape[1]].set(w)

    # fused head weights (each branch occupies its own 128-lane slab)
    wa_f = (jnp.zeros((dhp, tdhp), jnp.float32)
            .at[:dh, :dh].set(p["wa2"])
            .at[:dh, dhp:dhp + dh].set(p["wa3"]))
    wb_f = (jnp.zeros((tdhp, tdhp), jnp.float32)
            .at[:dh, :dh].set(p["wb2"])
            .at[dhp:dhp + dh, dhp:dhp + dh].set(p["wb3"]))
    w_out = (jnp.zeros((tdhp, outp), jnp.float32)
             .at[:dh, :H].set(p["wm"])
             .at[dhp:dhp + dh, H:H + Hc].set(p["wc"]))

    w_slab = jnp.concatenate(
        [pad_to(p["w1"], tdhp, dhp),
         pad_to(p["wa1"], tdhp, dhp),
         pad_to(p["wb1"], tdhp, dhp),
         pad_to(wa_f, tdhp, tdhp),
         wb_f,
         w_out],
        axis=1,
    ).astype(jnp.bfloat16)

    def row(v):
        return v.reshape(-1)

    vec = jnp.zeros((VEC_ROWS, tdhp), jnp.float32)
    vec = vec.at[0, :dh].set(row(p["b1"]))
    vec = vec.at[1, :dh].set(row(p["ba1"]))
    vec = vec.at[2, :dh].set(row(p["bb1"]))
    vec = vec.at[3, :dh].set(row(p["g1"]))
    vec = vec.at[4, :dh].set(row(p["be1"]))
    vec = vec.at[5, :dh].set(row(p["ba2"])).at[5, dhp:dhp + dh].set(row(p["ba3"]))
    vec = vec.at[6, :dh].set(row(p["bb2"])).at[6, dhp:dhp + dh].set(row(p["bb3"]))
    vec = vec.at[7, :dh].set(row(p["g2"])).at[7, dhp:dhp + dh].set(row(p["g3"]))
    vec = vec.at[8, :dh].set(row(p["be2"])).at[8, dhp:dhp + dh].set(row(p["be3"]))
    vec = vec.at[9, :H].set(row(p["bm"])).at[9, H:H + Hc].set(row(p["bc"]))
    return vec, w_slab


# ---------------------------------------------------------------------------
# Kernel + wrapper factory
# ---------------------------------------------------------------------------
def make_forward(D, H):
    dh = 5 * D
    Hc = (H * H - H) // 2
    dhp = _round_up(dh, 128)
    tdhp = 2 * dhp
    outp = _round_up(H + Hc, 128)

    def kernel(x_ref, vec_ref, w_ref, out_ref):
        B = x_ref.shape[0]
        inv_b = 1.0 / float(B)

        # --- packed biases / BN affine params (f32) ---
        vec = vec_ref[...]                       # (VEC_ROWS, tdhp)
        b1 = vec[0:1, :dhp]
        ba1 = vec[1:2, :dhp]
        bb1 = vec[2:3, :dhp]
        g1 = vec[3:4, :dhp]
        be1 = vec[4:5, :dhp]
        ba_f = vec[5:6, :]
        bb_f = vec[6:7, :]
        g_f = vec[7:8, :]
        be_f = vec[8:9, :]
        b_out = vec[9:10, :outp]

        # --- 128-lane-aligned column slices of the bf16 weight slab ---
        c = 0
        w1 = w_ref[:D, c:c + dhp]; c += dhp
        wa1 = w_ref[:dhp, c:c + dhp]; c += dhp
        wb1 = w_ref[:dhp, c:c + dhp]; c += dhp
        wa_f = w_ref[:dhp, c:c + tdhp]; c += tdhp
        wb_f = w_ref[:tdhp, c:c + tdhp]; c += tdhp
        w_o = w_ref[:tdhp, c:c + outp]

        def mm(a, w):
            # bf16 operands, f32 accumulation on the MXU.
            return jnp.dot(a.astype(jnp.bfloat16), w,
                           preferred_element_type=jnp.float32)

        def bn(h, gamma, beta):
            # Training-mode BatchNorm1d, single-traversal batch statistics.
            s1 = jnp.sum(h, axis=0, keepdims=True)
            s2 = jnp.sum(h * h, axis=0, keepdims=True)
            mu = s1 * inv_b
            var = s2 * inv_b - mu * mu
            return (h - mu) * jax.lax.rsqrt(var + EPS) * gamma + beta

        x = x_ref[...]

        # ---- nn_common: Linear -> ReLU -> ResBlock -> BatchNorm1d ----
        h = jnp.maximum(mm(x, w1) + b1, 0.0)
        t = jnp.maximum(mm(h, wa1) + ba1, 0.0)
        t = jnp.maximum(mm(t, wb1) + bb1, 0.0)
        common = bn(h + t, g1, be1)                      # (B, dhp)

        # ---- fused nn_mean | nn_cond heads (branch 2 lives at lanes dhp:) ---
        t = jnp.maximum(mm(common, wa_f) + ba_f, 0.0)    # (B, 2*dhp)
        t = jnp.maximum(mm(t, wb_f) + bb_f, 0.0)         # block-diagonal wb
        common2 = jnp.concatenate([common, common], axis=-1)
        hb = bn(common2 + t, g_f, be_f)                  # per-column BN == per-branch BN

        # block-diagonal output projection -> lane-dense [M | C] slab
        out_ref[...] = mm(hb, w_o) + b_out               # (B, outp) f32

    def forward(x, vec_pack, w_slab):
        B = x.shape[0]
        flops = 2 * B * (D * dhp + 2 * dhp * dhp + dhp * tdhp
                         + tdhp * tdhp + tdhp * outp)
        bytes_accessed = (x.size * 4 + vec_pack.size * 4
                          + w_slab.size * 2 + B * outp * 4)
        vmem = pl.BlockSpec(memory_space=pltpu.MemorySpace.VMEM)
        out = pl.pallas_call(
            kernel,
            out_shape=jax.ShapeDtypeStruct((B, outp), jnp.float32),
            in_specs=[vmem, vmem, vmem],
            out_specs=vmem,
            cost_estimate=pl.CostEstimate(
                flops=int(flops),
                transcendentals=int(dhp + tdhp),
                bytes_accessed=int(bytes_accessed)),
        )(x, vec_pack, w_slab)
        return out[:, :H], out[:, H:H + Hc]

    return jax.jit(forward)


# ---------------------------------------------------------------------------
# Deterministic parameter construction (PyTorch-style Linear init shapes):
# Linear weights pre-transposed to (in, out); biases / BN params as (1, dim).
# ---------------------------------------------------------------------------
def init_params(key, D, H):
    dh = 5 * D
    Hc = (H * H - H) // 2

    def linear(k, fan_in, fan_out):
        bound = 1.0 / math.sqrt(fan_in)
        kw, kb = jax.random.split(k)
        w = jax.random.uniform(kw, (fan_in, fan_out), jnp.float32, -bound, bound)
        b = jax.random.uniform(kb, (1, fan_out), jnp.float32, -bound, bound)
        return w, b

    ks = jax.random.split(key, 9)
    p = {}
    # nn_common
    p["w1"], p["b1"] = linear(ks[0], D, dh)
    p["wa1"], p["ba1"] = linear(ks[1], dh, dh)
    p["wb1"], p["bb1"] = linear(ks[2], dh, dh)
    p["g1"], p["be1"] = jnp.ones((1, dh), jnp.float32), jnp.zeros((1, dh), jnp.float32)
    # nn_mean
    p["wa2"], p["ba2"] = linear(ks[3], dh, dh)
    p["wb2"], p["bb2"] = linear(ks[4], dh, dh)
    p["g2"], p["be2"] = jnp.ones((1, dh), jnp.float32), jnp.zeros((1, dh), jnp.float32)
    p["wm"], p["bm"] = linear(ks[5], dh, H)
    # nn_cond
    p["wa3"], p["ba3"] = linear(ks[6], dh, dh)
    p["wb3"], p["bb3"] = linear(ks[7], dh, dh)
    p["g3"], p["be3"] = jnp.ones((1, dh), jnp.float32), jnp.zeros((1, dh), jnp.float32)
    p["wc"], p["bc"] = linear(ks[8], dh, Hc)
    return p


# ---------------------------------------------------------------------------
# Pure-JAX reference mirroring the PyTorch forward with identical numerics
# (bf16 matmul operands, f32 accumulation, single-traversal BN statistics).
# ---------------------------------------------------------------------------
def reference(x, p):
    def mm(a, w):
        return jnp.dot(a.astype(jnp.bfloat16), w.astype(jnp.bfloat16),
                       preferred_element_type=jnp.float32)

    def resblock(h, wa, ba, wb, bb):
        t = jnp.maximum(mm(h, wa) + ba, 0.0)
        t = jnp.maximum(mm(t, wb) + bb, 0.0)
        return h + t

    def bn(h, g, b):
        n = h.shape[0]
        mu = jnp.sum(h, axis=0, keepdims=True) / n
        var = jnp.sum(h * h, axis=0, keepdims=True) / n - mu * mu
        return (h - mu) * jax.lax.rsqrt(var + EPS) * g + b

    h = jnp.maximum(mm(x, p["w1"]) + p["b1"], 0.0)
    common = bn(resblock(h, p["wa1"], p["ba1"], p["wb1"], p["bb1"]), p["g1"], p["be1"])
    m = bn(resblock(common, p["wa2"], p["ba2"], p["wb2"], p["bb2"]), p["g2"], p["be2"])
    M = mm(m, p["wm"]) + p["bm"]
    c = bn(resblock(common, p["wa3"], p["ba3"], p["wb3"], p["bb3"]), p["g3"], p["be3"])
    C = mm(c, p["wc"]) + p["bc"]
    return M, C


if __name__ == "__main__":
    key = jax.random.PRNGKey(0)
    kx, kp = jax.random.split(key)

    # Small shapes consistent with the module: batch=32 points of dim D=16,
    # latent H=8  =>  hidden 5D=80, cond output (H*H-H)/2=28.
    B, D, H = 32, 16, 8
    Hc = (H * H - H) // 2
    x = jax.random.normal(kx, (B, D), jnp.float32)
    indexes = jnp.arange(B, dtype=jnp.int32)  # API parity; forward never reads it
    params = init_params(kp, D, H)

    vec_pack, w_slab = pack_params(params, D, H)   # one-time layout plumbing
    forward = make_forward(D, H)

    M, C = forward(x, vec_pack, w_slab)
    jax.block_until_ready((M, C))

    M_ref, C_ref = reference(x, params)
    assert M.shape == (B, H) and C.shape == (B, Hc)
    assert jnp.allclose(M, M_ref, atol=2e-3, rtol=2e-3)
    assert jnp.allclose(C, C_ref, atol=2e-3, rtol=2e-3)

    print("KERNEL_OK")
</pallas_src>

<mosaic_0001>
module attributes {stable_mosaic.version = 11 : i64} {
  func.func @kernel(%arg0: memref<32x16xf32, #tpu.memory_space<vmem>>, %arg1: memref<16x256xf32, #tpu.memory_space<vmem>>, %arg2: memref<256x1024xbf16, #tpu.memory_space<vmem>>, %arg3: memref<32x128xf32, #tpu.memory_space<vmem>>) attributes {dimension_semantics = [], scalar_prefetch = 0 : i64, scratch_operands = 0 : i64, tpu.core_type = #tpu.core_type<tc>} {
    %c0 = arith.constant 0 : index
    %c0_0 = arith.constant 0 : index
    %0 = vector.load %arg1[%c0, %c0_0] : memref<16x256xf32, #tpu.memory_space<vmem>>, vector<16x256xf32>
    %1 = vector.extract_strided_slice %0 {offsets = [0, 0], sizes = [1, 128], strides = [1, 1]} : vector<16x256xf32> to vector<1x128xf32>
    %2 = vector.extract_strided_slice %0 {offsets = [1, 0], sizes = [1, 128], strides = [1, 1]} : vector<16x256xf32> to vector<1x128xf32>
    %3 = vector.extract_strided_slice %0 {offsets = [2, 0], sizes = [1, 128], strides = [1, 1]} : vector<16x256xf32> to vector<1x128xf32>
    %4 = vector.extract_strided_slice %0 {offsets = [3, 0], sizes = [1, 128], strides = [1, 1]} : vector<16x256xf32> to vector<1x128xf32>
    %5 = vector.extract_strided_slice %0 {offsets = [4, 0], sizes = [1, 128], strides = [1, 1]} : vector<16x256xf32> to vector<1x128xf32>
    %6 = vector.extract_strided_slice %0 {offsets = [5, 0], sizes = [1, 256], strides = [1, 1]} : vector<16x256xf32> to vector<1x256xf32>
    %7 = vector.extract_strided_slice %0 {offsets = [6, 0], sizes = [1, 256], strides = [1, 1]} : vector<16x256xf32> to vector<1x256xf32>
    %8 = vector.extract_strided_slice %0 {offsets = [7, 0], sizes = [1, 256], strides = [1, 1]} : vector<16x256xf32> to vector<1x256xf32>
    %9 = vector.extract_strided_slice %0 {offsets = [8, 0], sizes = [1, 256], strides = [1, 1]} : vector<16x256xf32> to vector<1x256xf32>
    %10 = vector.extract_strided_slice %0 {offsets = [9, 0], sizes = [1, 128], strides = [1, 1]} : vector<16x256xf32> to vector<1x128xf32>
    %c0_1 = arith.constant 0 : index
    %c0_2 = arith.constant 0 : index
    %11 = vector.load %arg2[%c0_1, %c0_2] : memref<256x1024xbf16, #tpu.memory_space<vmem>>, vector<16x128xbf16>
    %c0_3 = arith.constant 0 : index
    %c128 = arith.constant 128 : index
    %12 = vector.load %arg2[%c0_3, %c128] : memref<256x1024xbf16, #tpu.memory_space<vmem>>, vector<128x128xbf16>
    %c0_4 = arith.constant 0 : index
    %c256 = arith.constant 256 : index
    %13 = vector.load %arg2[%c0_4, %c256] : memref<256x1024xbf16, #tpu.memory_space<vmem>>, vector<128x128xbf16>
    %c0_5 = arith.constant 0 : index
    %c384 = arith.constant 384 : index
    %14 = vector.load %arg2[%c0_5, %c384] : memref<256x1024xbf16, #tpu.memory_space<vmem>>, vector<128x256xbf16>
    %c0_6 = arith.constant 0 : index
    %c640 = arith.constant 640 : index
    %15 = vector.load %arg2[%c0_6, %c640] : memref<256x1024xbf16, #tpu.memory_space<vmem>>, vector<256x256xbf16>
    %c0_7 = arith.constant 0 : index
    %c896 = arith.constant 896 : index
    %16 = vector.load %arg2[%c0_7, %c896] : memref<256x1024xbf16, #tpu.memory_space<vmem>>, vector<256x128xbf16>
    %c0_8 = arith.constant 0 : index
    %c0_9 = arith.constant 0 : index
    %17 = vector.load %arg0[%c0_8, %c0_9] : memref<32x16xf32, #tpu.memory_space<vmem>>, vector<32x16xf32>
    %18 = arith.truncf %17 : vector<32x16xf32> to vector<32x16xbf16>
    %cst = arith.constant dense<0.000000e+00> : vector<32x128xf32>
    %19 = tpu.matmul %18, %11, %cst {dimension_numbers = #tpu.dot_dimension_numbers<[1], [0], [0], [1], [0, 0, 1, 1], [], []>} : vector<32x16xbf16>, vector<16x128xbf16>, vector<32x128xf32> -> vector<32x128xf32>
    %20 = vector.broadcast %1 : vector<1x128xf32> to vector<32x128xf32>
    %21 = arith.addf %19, %20 : vector<32x128xf32>
    %cst_10 = arith.constant 0.000000e+00 : f32
    %22 = vector.broadcast %cst_10 : f32 to vector<32x128xf32>
    %23 = arith.maximumf %21, %22 : vector<32x128xf32>
    %24 = arith.truncf %23 : vector<32x128xf32> to vector<32x128xbf16>
    %cst_11 = arith.constant dense<0.000000e+00> : vector<32x128xf32>
    %25 = tpu.matmul %24, %12, %cst_11 {dimension_numbers = #tpu.dot_dimension_numbers<[1], [0], [0], [1], [0, 0, 1, 1], [], []>} : vector<32x128xbf16>, vector<128x128xbf16>, vector<32x128xf32> -> vector<32x128xf32>
    %26 = vector.broadcast %2 : vector<1x128xf32> to vector<32x128xf32>
    %27 = arith.addf %25, %26 : vector<32x128xf32>
    %cst_12 = arith.constant 0.000000e+00 : f32
    %28 = vector.broadcast %cst_12 : f32 to vector<32x128xf32>
    %29 = arith.maximumf %27, %28 : vector<32x128xf32>
    %30 = arith.truncf %29 : vector<32x128xf32> to vector<32x128xbf16>
    %cst_13 = arith.constant dense<0.000000e+00> : vector<32x128xf32>
    %31 = tpu.matmul %30, %13, %cst_13 {dimension_numbers = #tpu.dot_dimension_numbers<[1], [0], [0], [1], [0, 0, 1, 1], [], []>} : vector<32x128xbf16>, vector<128x128xbf16>, vector<32x128xf32> -> vector<32x128xf32>
    %32 = vector.broadcast %3 : vector<1x128xf32> to vector<32x128xf32>
    %33 = arith.addf %31, %32 : vector<32x128xf32>
    %cst_14 = arith.constant 0.000000e+00 : f32
    %34 = vector.broadcast %cst_14 : f32 to vector<32x128xf32>
    %35 = arith.maximumf %33, %34 : vector<32x128xf32>
    %36 = arith.addf %23, %35 : vector<32x128xf32>
    %cst_15 = arith.constant dense<0.000000e+00> : vector<128xf32>
    %37 = vector.multi_reduction <add>, %36, %cst_15 [0] : vector<32x128xf32> to vector<128xf32>
    %38 = vector.shape_cast %37 : vector<128xf32> to vector<1x128xf32>
    %39 = arith.mulf %36, %36 : vector<32x128xf32>
    %cst_16 = arith.constant dense<0.000000e+00> : vector<128xf32>
    %40 = vector.multi_reduction <add>, %39, %cst_16 [0] : vector<32x128xf32> to vector<128xf32>
    %41 = vector.shape_cast %40 : vector<128xf32> to vector<1x128xf32>
    %cst_17 = arith.constant 3.125000e-02 : f32
    %42 = vector.broadcast %cst_17 : f32 to vector<1x128xf32>
    %43 = arith.mulf %38, %42 : vector<1x128xf32>
    %cst_18 = arith.constant 3.125000e-02 : f32
    %44 = vector.broadcast %cst_18 : f32 to vector<1x128xf32>
    %45 = arith.mulf %41, %44 : vector<1x128xf32>
    %46 = arith.mulf %43, %43 : vector<1x128xf32>
    %47 = arith.subf %45, %46 : vector<1x128xf32>
    %48 = vector.broadcast %43 : vector<1x128xf32> to vector<32x128xf32>
    %49 = arith.subf %36, %48 : vector<32x128xf32>
    %cst_19 = arith.constant 9.99999974E-6 : f32
    %50 = vector.broadcast %cst_19 : f32 to vector<1x128xf32>
    %51 = arith.addf %47, %50 : vector<1x128xf32>
    %52 = math.rsqrt %51 : vector<1x128xf32>
    %53 = vector.broadcast %52 : vector<1x128xf32> to vector<32x128xf32>
    %54 = arith.mulf %49, %53 : vector<32x128xf32>
    %55 = vector.broadcast %4 : vector<1x128xf32> to vector<32x128xf32>
    %56 = arith.mulf %54, %55 : vector<32x128xf32>
    %57 = vector.broadcast %5 : vector<1x128xf32> to vector<32x128xf32>
    %58 = arith.addf %56, %57 : vector<32x128xf32>
    %59 = arith.truncf %58 : vector<32x128xf32> to vector<32x128xbf16>
    %cst_20 = arith.constant dense<0.000000e+00> : vector<32x256xf32>
    %60 = tpu.matmul %59, %14, %cst_20 {dimension_numbers = #tpu.dot_dimension_numbers<[1], [0], [0], [1], [0, 0, 1, 1], [], []>} : vector<32x128xbf16>, vector<128x256xbf16>, vector<32x256xf32> -> vector<32x256xf32>
    %61 = vector.broadcast %6 : vector<1x256xf32> to vector<32x256xf32>
    %62 = arith.addf %60, %61 : vector<32x256xf32>
    %cst_21 = arith.constant 0.000000e+00 : f32
    %63 = vector.broadcast %cst_21 : f32 to vector<32x256xf32>
    %64 = arith.maximumf %62, %63 : vector<32x256xf32>
    %65 = arith.truncf %64 : vector<32x256xf32> to vector<32x256xbf16>
    %cst_22 = arith.constant dense<0.000000e+00> : vector<32x256xf32>
    %66 = tpu.matmul %65, %15, %cst_22 {dimension_numbers = #tpu.dot_dimension_numbers<[1], [0], [0], [1], [0, 0, 1, 1], [], []>} : vector<32x256xbf16>, vector<256x256xbf16>, vector<32x256xf32> -> vector<32x256xf32>
    %67 = vector.broadcast %7 : vector<1x256xf32> to vector<32x256xf32>
    %68 = arith.addf %66, %67 : vector<32x256xf32>
    %cst_23 = arith.constant 0.000000e+00 : f32
    %69 = vector.broadcast %cst_23 : f32 to vector<32x256xf32>
    %70 = arith.maximumf %68, %69 : vector<32x256xf32>
    %71 = tpu.concatenate %58, %58 in 1 : vector<32x128xf32>, vector<32x128xf32> -> vector<32x256xf32>
    %72 = arith.addf %71, %70 : vector<32x256xf32>
    %cst_24 = arith.constant dense<0.000000e+00> : vector<256xf32>
    %73 = vector.multi_reduction <add>, %72, %cst_24 [0] : vector<32x256xf32> to vector<256xf32>
    %74 = vector.shape_cast %73 : vector<256xf32> to vector<1x256xf32>
    %75 = arith.mulf %72, %72 : vector<32x256xf32>
    %cst_25 = arith.constant dense<0.000000e+00> : vector<256xf32>
    %76 = vector.multi_reduction <add>, %75, %cst_25 [0] : vector<32x256xf32> to vector<256xf32>
    %77 = vector.shape_cast %76 : vector<256xf32> to vector<1x256xf32>
    %cst_26 = arith.constant 3.125000e-02 : f32
    %78 = vector.broadcast %cst_26 : f32 to vector<1x256xf32>
    %79 = arith.mulf %74, %78 : vector<1x256xf32>
    %cst_27 = arith.constant 3.125000e-02 : f32
    %80 = vector.broadcast %cst_27 : f32 to vector<1x256xf32>
    %81 = arith.mulf %77, %80 : vector<1x256xf32>
    %82 = arith.mulf %79, %79 : vector<1x256xf32>
    %83 = arith.subf %81, %82 : vector<1x256xf32>
    %84 = vector.broadcast %79 : vector<1x256xf32> to vector<32x256xf32>
    %85 = arith.subf %72, %84 : vector<32x256xf32>
    %cst_28 = arith.constant 9.99999974E-6 : f32
    %86 = vector.broadcast %cst_28 : f32 to vector<1x256xf32>
    %87 = arith.addf %83, %86 : vector<1x256xf32>
    %88 = math.rsqrt %87 : vector<1x256xf32>
    %89 = vector.broadcast %88 : vector<1x256xf32> to vector<32x256xf32>
    %90 = arith.mulf %85, %89 : vector<32x256xf32>
    %91 = vector.broadcast %8 : vector<1x256xf32> to vector<32x256xf32>
    %92 = arith.mulf %90, %91 : vector<32x256xf32>
    %93 = vector.broadcast %9 : vector<1x256xf32> to vector<32x256xf32>
    %94 = arith.addf %92, %93 : vector<32x256xf32>
    %95 = arith.truncf %94 : vector<32x256xf32> to vector<32x256xbf16>
    %cst_29 = arith.constant dense<0.000000e+00> : vector<32x128xf32>
    %96 = tpu.matmul %95, %16, %cst_29 {dimension_numbers = #tpu.dot_dimension_numbers<[1], [0], [0], [1], [0, 0, 1, 1], [], []>} : vector<32x256xbf16>, vector<256x128xbf16>, vector<32x128xf32> -> vector<32x128xf32>
    %97 = vector.broadcast %10 : vector<1x128xf32> to vector<32x128xf32>
    %98 = arith.addf %96, %97 : vector<32x128xf32>
    %c0_30 = arith.constant 0 : index
    %c0_31 = arith.constant 0 : index
    %99 = vector.load %arg3[%c0_30, %c0_31] : memref<32x128xf32, #tpu.memory_space<vmem>>, vector<32x128xf32>
    tpu.vector_store %arg3[%c0_30, %c0_31], %98 {strides = array<i32>} : memref<32x128xf32, #tpu.memory_space<vmem>>, vector<32x128xf32>,
    return
  }
}

</mosaic_0001>

<llo_original>
// kernel: forward.1
$region0: #{forward.1}
  #allocation0 [shape = 'u32[]', space=smem, size = 0x4, offset = 0x4, fixed_abs, tag = 'smem constant byte address 0x4 - core index']
  #allocation1 [shape = 'u32[144,128]{1,0:T(1,128)}', space=vmem, size = 0x12000, scoped, tag = 'internal scratch']
  %s0 = inlined_call_operand.vmem [shape: f32[32,16], index: 0, kind: input, shape index: {}]
  %s1 = inlined_call_operand.vmem [shape: f32[16,256], index: 1, kind: input, shape index: {}]
  %s2 = inlined_call_operand.hbm [shape: bf16[256,1024], index: 2, kind: input, shape index: {}]
  %s3 = inlined_call_operand.vmem [shape: f32[32,128], index: 3, kind: output, shape index: {}]
  %s4 = sld [smem:[#allocation0]]
  $region26: #{forward.1} parent=0
    _
  %s6 = ssub.s32 1, %s4
  %s7 = scalar_select 0, %s6, %s4
  $region1: #{forward.1} parent=0
    #allocation2 [shape = 'u8[524288]{0}', space=vmem, size = 0x80000, scoped, tag = 'input window, operand 2, single buffered']
    #allocation3 [shape = 's32[1]{0}', space=sflag, size = 0x4, scoped, tag = 'scoped memory for forward.1']
    %8 = vsyncpa [#allocation3], 0
    // Predicated region
    $region2: #{forward.1} parent=1 // pred_check
      _
    $region3: #{forward.1} parent=1 // pred_check_branch
      %10 = sbr.rel (0) target = $region5
    $region4: #{forward.1} parent=1 // pred_region
      _
    $region5: #{forward.1} parent=1 // pred_fallthru
      _
    // Predicated region
    $region6: #{forward.1} parent=1 // pred_check
      _
    $region7: #{forward.1} parent=1 // pred_check_branch
      %12 = sbr.rel (0) target = $region9
    $region8: #{forward.1} parent=1 // pred_region
      _
    $region9: #{forward.1} parent=1 // pred_fallthru
      _
    // Predicated region
    $region10: #{forward.1} parent=1 // pred_check
      _
    $region11: #{forward.1} parent=1 // pred_check_branch
      %14 = sbr.rel (0) target = $region13
    $region12: #{forward.1} parent=1 // pred_region
      %s16 = ssub.s32 16384, 16384
      %17 = vsyncadd [#allocation3], %s16
      %s18 = sshll.u32 [#allocation2], 4
      %s19 = int_to_ptr.vmem [resolvable:$true] %s18
      %24 = dma.hbm_to_vmem [thread:$0]  %s2, 16384, %s19, [#allocation3], 512, 512, 32
    $region13: #{forward.1} parent=1 // pred_fallthru
      _
    // Predicated region
    $region14: #{forward.1} parent=1 // pred_check
      _
    $region15: #{forward.1} parent=1 // pred_check_branch
      %26 = sbr.rel (0) target = $region17
    $region16: #{forward.1} parent=1 // pred_region
      %27 = dma.done [#allocation3], 16384
    $region17: #{forward.1} parent=1 // pred_fallthru
      _
    %v29 = vld [vmem:[%s1] sm:$0xff]
    %v30 = vld [vmem:[%s1 + $0x8] sm:$0xff]
    %v31 = vld [vmem:[%s1 + $0x10] sm:$0xff]
    %v32 = vld [vmem:[%s1 + $0x18] sm:$0xff]
    %v33 = vld [vmem:[#allocation2] sm:$0xf]
    %v34 = vld [vmem:[#allocation2 + $0x20] sm:$0xf]
    %v35 = vld [vmem:[#allocation2 + $0x4] sm:$0xf]
    %v36 = vld [vmem:[#allocation2 + $0x24] sm:$0xf]
    %v37 = vld [vmem:[#allocation2 + $0x44] sm:$0xf]
    %v38 = vld [vmem:[#allocation2 + $0x64] sm:$0xf]
    %v39 = vld [vmem:[#allocation2 + $0x84] sm:$0xf]
    %v40 = vld [vmem:[#allocation2 + $0xa4] sm:$0xf]
    %v41 = vld [vmem:[#allocation2 + $0xc4] sm:$0xf]
    %v42 = vld [vmem:[#allocation2 + $0xe4] sm:$0xf]
    %v43 = vld [vmem:[#allocation2 + $0x104] sm:$0xf]
    %v44 = vld [vmem:[#allocation2 + $0x124] sm:$0xf]
    %v45 = vld [vmem:[#allocation2 + $0x144] sm:$0xf]
    %v46 = vld [vmem:[#allocation2 + $0x164] sm:$0xf]
    %v47 = vld [vmem:[#allocation2 + $0x184] sm:$0xf]
    %v48 = vld [vmem:[#allocation2 + $0x1a4] sm:$0xf]
    %v49 = vld [vmem:[#allocation2 + $0x1c4] sm:$0xf]
    %v50 = vld [vmem:[#allocation2 + $0x1e4] sm:$0xf]
    %v51 = vld [vmem:[#allocation2 + $0x8] sm:$0xf]
    %v52 = vld [vmem:[#allocation2 + $0x28] sm:$0xf]
    %v53 = vld [vmem:[#allocation2 + $0x48] sm:$0xf]
    %v54 = vld [vmem:[#allocation2 + $0x68] sm:$0xf]
    %v55 = vld [vmem:[#allocation2 + $0x88] sm:$0xf]
    %v56 = vld [vmem:[#allocation2 + $0xa8] sm:$0xf]
    %v57 = vld [vmem:[#allocation2 + $0xc8] sm:$0xf]
    %v58 = vld [vmem:[#allocation2 + $0xe8] sm:$0xf]
    %v59 = vld [vmem:[#allocation2 + $0x108] sm:$0xf]
    %v60 = vld [vmem:[#allocation2 + $0x128] sm:$0xf]
    %v61 = vld [vmem:[#allocation2 + $0x148] sm:$0xf]
    %v62 = vld [vmem:[#allocation2 + $0x168] sm:$0xf]
    %v63 = vld [vmem:[#allocation2 + $0x188] sm:$0xf]
    %v64 = vld [vmem:[#allocation2 + $0x1a8] sm:$0xf]
    %v65 = vld [vmem:[#allocation2 + $0x1c8] sm:$0xf]
    %v66 = vld [vmem:[#allocation2 + $0x1e8] sm:$0xf]
    %v67 = vld [vmem:[#allocation2 + $0xc] sm:$0xff]
    %v68 = vld [vmem:[#allocation2 + $0x2c] sm:$0xff]
    %v69 = vld [vmem:[#allocation2 + $0x4c] sm:$0xff]
    %v70 = vld [vmem:[#allocation2 + $0x6c] sm:$0xff]
    %v71 = vld [vmem:[#allocation2 + $0x8c] sm:$0xff]
    %v72 = vld [vmem:[#allocation2 + $0xac] sm:$0xff]
    %v73 = vld [vmem:[#allocation2 + $0xcc] sm:$0xff]
    %v74 = vld [vmem:[#allocation2 + $0xec] sm:$0xff]
    %v75 = vld [vmem:[#allocation2 + $0x10c] sm:$0xff]
    %v76 = vld [vmem:[#allocation2 + $0x12c] sm:$0xff]
    %v77 = vld [vmem:[#allocation2 + $0x14c] sm:$0xff]
    %v78 = vld [vmem:[#allocation2 + $0x16c] sm:$0xff]
    %v79 = vld [vmem:[#allocation2 + $0x18c] sm:$0xff]
    %v80 = vld [vmem:[#allocation2 + $0x1ac] sm:$0xff]
    %v81 = vld [vmem:[#allocation2 + $0x1cc] sm:$0xff]
    %v82 = vld [vmem:[#allocation2 + $0x1ec] sm:$0xff]
    %v83 = vld [vmem:[#allocation2 + $0x14] sm:$0xff]
    %v84 = vld [vmem:[#allocation2 + $0x34] sm:$0xff]
    %v85 = vld [vmem:[#allocation2 + $0x54] sm:$0xff]
    %v86 = vld [vmem:[#allocation2 + $0x74] sm:$0xff]
    %v87 = vld [vmem:[#allocation2 + $0x94] sm:$0xff]
    %v88 = vld [vmem:[#allocation2 + $0xb4] sm:$0xff]
    %v89 = vld [vmem:[#allocation2 + $0xd4] sm:$0xff]
    %v90 = vld [vmem:[#allocation2 + $0xf4] sm:$0xff]
    %v91 = vld [vmem:[#allocation2 + $0x114] sm:$0xff]
    %v92 = vld [vmem:[#allocation2 + $0x134] sm:$0xff]
    %v93 = vld [vmem:[#allocation2 + $0x154] sm:$0xff]
    %v94 = vld [vmem:[#allocation2 + $0x174] sm:$0xff]
    %v95 = vld [vmem:[#allocation2 + $0x194] sm:$0xff]
    %v96 = vld [vmem:[#allocation2 + $0x1b4] sm:$0xff]
    %v97 = vld [vmem:[#allocation2 + $0x1d4] sm:$0xff]
    %v98 = vld [vmem:[#allocation2 + $0x1f4] sm:$0xff]
    %v99 = vld [vmem:[#allocation2 + $0x214] sm:$0xff]
    %v100 = vld [vmem:[#allocation2 + $0x234] sm:$0xff]
    %v101 = vld [vmem:[#allocation2 + $0x254] sm:$0xff]
    %v102 = vld [vmem:[#allocation2 + $0x274] sm:$0xff]
    %v103 = vld [vmem:[#allocation2 + $0x294] sm:$0xff]
    %v104 = vld [vmem:[#allocation2 + $0x2b4] sm:$0xff]
    %v105 = vld [vmem:[#allocation2 + $0x2d4] sm:$0xff]
    %v106 = vld [vmem:[#allocation2 + $0x2f4] sm:$0xff]
    %v107 = vld [vmem:[#allocation2 + $0x314] sm:$0xff]
    %v108 = vld [vmem:[#allocation2 + $0x334] sm:$0xff]
    %v109 = vld [vmem:[#allocation2 + $0x354] sm:$0xff]
    %v110 = vld [vmem:[#allocation2 + $0x374] sm:$0xff]
    %v111 = vld [vmem:[#allocation2 + $0x394] sm:$0xff]
    %v112 = vld [vmem:[#allocation2 + $0x3b4] sm:$0xff]
    %v113 = vld [vmem:[#allocation2 + $0x3d4] sm:$0xff]
    %v114 = vld [vmem:[#allocation2 + $0x3f4] sm:$0xff]
    %v115 = vld [vmem:[#allocation2 + $0x1c] sm:$0xf]
    %v116 = vld [vmem:[#allocation2 + $0x3c] sm:$0xf]
    %v117 = vld [vmem:[#allocation2 + $0x5c] sm:$0xf]
    %v118 = vld [vmem:[#allocation2 + $0x7c] sm:$0xf]
    %v119 = vld [vmem:[#allocation2 + $0x9c] sm:$0xf]
    %v120 = vld [vmem:[#allocation2 + $0xbc] sm:$0xf]
    %v121 = vld [vmem:[#allocation2 + $0xdc] sm:$0xf]
    %v122 = vld [vmem:[#allocation2 + $0xfc] sm:$0xf]
    %v123 = vld [vmem:[#allocation2 + $0x11c] sm:$0xf]
    %v124 = vld [vmem:[#allocation2 + $0x13c] sm:$0xf]
    %v125 = vld [vmem:[#allocation2 + $0x15c] sm:$0xf]
    %v126 = vld [vmem:[#allocation2 + $0x17c] sm:$0xf]
    %v127 = vld [vmem:[#allocation2 + $0x19c] sm:$0xf]
    %v128 = vld [vmem:[#allocation2 + $0x1bc] sm:$0xf]
    %v129 = vld [vmem:[#allocation2 + $0x1dc] sm:$0xf]
    %v130 = vld [vmem:[#allocation2 + $0x1fc] sm:$0xf]
    %v131 = vld [vmem:[#allocation2 + $0x21c] sm:$0xf]
    %v132 = vld [vmem:[#allocation2 + $0x23c] sm:$0xf]
    %v133 = vld [vmem:[#allocation2 + $0x25c] sm:$0xf]
    %v134 = vld [vmem:[#allocation2 + $0x27c] sm:$0xf]
    %v135 = vld [vmem:[#allocation2 + $0x29c] sm:$0xf]
    %v136 = vld [vmem:[#allocation2 + $0x2bc] sm:$0xf]
    %v137 = vld [vmem:[#allocation2 + $0x2dc] sm:$0xf]
    %v138 = vld [vmem:[#allocation2 + $0x2fc] sm:$0xf]
    %v139 = vld [vmem:[#allocation2 + $0x31c] sm:$0xf]
    %v140 = vld [vmem:[#allocation2 + $0x33c] sm:$0xf]
    %v141 = vld [vmem:[#allocation2 + $0x35c] sm:$0xf]
    %v142 = vld [vmem:[#allocation2 + $0x37c] sm:$0xf]
    %v143 = vld [vmem:[#allocation2 + $0x39c] sm:$0xf]
    %v144 = vld [vmem:[#allocation2 + $0x3bc] sm:$0xf]
    %v145 = vld [vmem:[#allocation2 + $0x3dc] sm:$0xf]
    %v146 = vld [vmem:[#allocation2 + $0x3fc] sm:$0xf]
    %v147 = vld [vmem:[%s0] sm:$0xff]
    %v148 = vld [vmem:[%s0 + $0x8] sm:$0xff]
    %v149 = vld [vmem:[%s0 + $0x10] sm:$0xff]
    %v150 = vld [vmem:[%s0 + $0x18] sm:$0xff]
    %v151 = vpack.c.bf16 %v148, %v147
    %v152 = vpack.c.bf16 %v150, %v149
    %v153 = vlaneseq
    %v154 = vshrl.u32 %v153, 7
    %v155 = vsub.s32 0, %v154
    %v156 = vrot.slane %v29, %v155
    %v159 = vunpack.c.l.b16 %v33
    %v160 = vunpack.c.l.b16 %v34
    %v161 = vpack.c.b16 %v160, %v159
    %vm163 = vcmask 130048
    %v165 = vsel %vm163, %v151, 0
    %v168 = vsel %vm163, %v152, 0
    %170 = vmatprep.subr.bf16.mxu0 0
    %171 = vmatpush1.bf16.msra.mxu0 0
    %172 = vmatprep.subr.bf16.mxu0 0
    %173 = vmatpush1.bf16.msra.mxu0 0
    %174 = vmatprep.subr.bf16.mxu0 0
    %175 = vmatpush1.bf16.msra.mxu0 0
    %176 = vmatprep.subr.bf16.mxu0 0
    %177 = vmatpush1.bf16.msra.mxu0 0
    %178 = vmatprep.subr.bf16.mxu0 0
    %179 = vmatpush1.bf16.msra.mxu0 0
    %180 = vmatprep.subr.bf16.mxu0 0
    %181 = vmatpush1.bf16.msra.mxu0 0
    %182 = vmatprep.subr.bf16.mxu0 0
    %183 = vmatpush1.bf16.msra.mxu0 0
    %184 = vmatprep.subr.bf16.mxu0 0
    %185 = vmatpush1.bf16.msra.mxu0 %v161
    %186 = vmatprep.subr.bf16.mxu0 0
    %187 = vmatpush2.bf16.msra.mxu0 0
    %188 = vmatprep.subr.bf16.mxu0 0
    %189 = vmatpush2.bf16.msra.mxu0 0
    %190 = vmatprep.subr.bf16.mxu0 0
    %191 = vmatpush2.bf16.msra.mxu0 0
    %192 = vmatprep.subr.bf16.mxu0 0
    %193 = vmatpush2.bf16.msra.mxu0 0
    %194 = vmatprep.subr.bf16.mxu0 0
    %195 = vmatpush2.bf16.msra.mxu0 0
    %196 = vmatprep.subr.bf16.mxu0 0
    %197 = vmatpush2.bf16.msra.mxu0 0
    %198 = vmatprep.subr.bf16.mxu0 0
    %199 = vmatpush2.bf16.msra.mxu0 0
    %200 = vmatprep.subr.bf16.mxu0 0
    %201 = vmatpush2.bf16.msra.mxu0 0
    %202 = vmatprep.mubr.bf16.mxu0 0
    %203 = vmatmul.mubr.bf16.gmra.mxu0 %v165
    %v204 = vpop.f32.mrf.mxu0
    %v205 = vadd.f32 %v156, %v204
    %v206 = vpop.f32.mrf.mxu0
    %v207 = vpop.f32.mrf.mxu0
    %v208 = vadd.f32 %v156, %v207
    %v209 = vpop.f32.mrf.mxu0
    %210 = vmatprep.mubr.bf16.mxu0 0
    %211 = vmatmul.mubr.bf16.gmra.mxu0 %v168
    %v212 = vpop.f32.mrf.mxu0
    %v213 = vadd.f32 %v156, %v212
    %v214 = vpop.f32.mrf.mxu0
    %v215 = vpop.f32.mrf.mxu0
    %v216 = vadd.f32 %v156, %v215
    %v217 = vpop.f32.mrf.mxu0
    %218 = vdwg.mxu0
    %v219 = vmax.f32 %v205, 0.0
    %v220 = vmax.f32 %v208, 0.0
    %v221 = vmax.f32 %v213, 0.0
    %v222 = vmax.f32 %v216, 0.0
    %v223 = vpack.c.bf16 %v220, %v219
    %v224 = vpack.c.bf16 %v222, %v221
    %v225 = vlaneseq
    %v226 = vshrl.u32 %v225, 7
    %v227 = vsub.s32 1, %v226
    %v228 = vrot.slane %v29, %v227
    %v245 = vunpack.c.l.b16 %v35
    %v246 = vunpack.c.l.b16 %v36
    %v247 = vunpack.c.l.b16 %v37
    %v248 = vunpack.c.l.b16 %v38
    %v249 = vunpack.c.l.b16 %v39
    %v250 = vunpack.c.l.b16 %v40
    %v251 = vunpack.c.l.b16 %v41
    %v252 = vunpack.c.l.b16 %v42
    %v253 = vunpack.c.l.b16 %v43
    %v254 = vunpack.c.l.b16 %v44
    %v255 = vunpack.c.l.b16 %v45
    %v256 = vunpack.c.l.b16 %v46
    %v257 = vunpack.c.l.b16 %v47
    %v258 = vunpack.c.l.b16 %v48
    %v259 = vunpack.c.l.b16 %v49
    %v260 = vunpack.c.l.b16 %v50
    %v261 = vpack.c.b16 %v246, %v245
    %v262 = vpack.c.b16 %v248, %v247
    %v263 = vpack.c.b16 %v250, %v249
    %v264 = vpack.c.b16 %v252, %v251
    %v265 = vpack.c.b16 %v254, %v253
    %v266 = vpack.c.b16 %v256, %v255
    %v267 = vpack.c.b16 %v258, %v257
    %v268 = vpack.c.b16 %v260, %v259
    %277 = vmatprep.subr.bf16.mxu0 0
    %278 = vmatpush1.bf16.msra.mxu0 %v268
    %279 = vmatprep.subr.bf16.mxu0 0
    %280 = vmatpush1.bf16.msra.mxu0 %v267
    %281 = vmatprep.subr.bf16.mxu0 0
    %282 = vmatpush1.bf16.msra.mxu0 %v266
    %283 = vmatprep.subr.bf16.mxu0 0
    %284 = vmatpush1.bf16.msra.mxu0 %v265
    %285 = vmatprep.subr.bf16.mxu0 0
    %286 = vmatpush1.bf16.msra.mxu0 %v264
    %287 = vmatprep.subr.bf16.mxu0 0
    %288 = vmatpush1.bf16.msra.mxu0 %v263
    %289 = vmatprep.subr.bf16.mxu0 0
    %290 = vmatpush1.bf16.msra.mxu0 %v262
    %291 = vmatprep.subr.bf16.mxu0 0
    %292 = vmatpush1.bf16.msra.mxu0 %v261
    %293 = vmatprep.subr.bf16.mxu0 0
    %294 = vmatpush2.bf16.msra.mxu0 0
    %295 = vmatprep.subr.bf16.mxu0 0
    %296 = vmatpush2.bf16.msra.mxu0 0
    %297 = vmatprep.subr.bf16.mxu0 0
    %298 = vmatpush2.bf16.msra.mxu0 0
    %299 = vmatprep.subr.bf16.mxu0 0
    %300 = vmatpush2.bf16.msra.mxu0 0
    %301 = vmatprep.subr.bf16.mxu0 0
    %302 = vmatpush2.bf16.msra.mxu0 0
    %303 = vmatprep.subr.bf16.mxu0 0
    %304 = vmatpush2.bf16.msra.mxu0 0
    %305 = vmatprep.subr.bf16.mxu0 0
    %306 = vmatpush2.bf16.msra.mxu0 0
    %307 = vmatprep.subr.bf16.mxu0 0
    %308 = vmatpush2.bf16.msra.mxu0 0
    %309 = vmatprep.mubr.bf16.mxu0 0
    %310 = vmatmul.mubr.bf16.gmra.mxu0 %v223
    %v311 = vpop.f32.mrf.mxu0
    %v312 = vadd.f32 %v228, %v311
    %v313 = vpop.f32.mrf.mxu0
    %v314 = vpop.f32.mrf.mxu0
    %v315 = vadd.f32 %v228, %v314
    %v316 = vpop.f32.mrf.mxu0
    %317 = vmatprep.mubr.bf16.mxu0 0
    %318 = vmatmul.mubr.bf16.gmra.mxu0 %v224
    %v319 = vpop.f32.mrf.mxu0
    %v320 = vadd.f32 %v228, %v319
    %v321 = vpop.f32.mrf.mxu0
    %v322 = vpop.f32.mrf.mxu0
    %v323 = vadd.f32 %v228, %v322
    %v324 = vpop.f32.mrf.mxu0
    %325 = vdwg.mxu0
    %v326 = vmax.f32 %v312, 0.0
    %v327 = vmax.f32 %v315, 0.0
    %v328 = vmax.f32 %v320, 0.0
    %v329 = vmax.f32 %v323, 0.0
    %v330 = vpack.c.bf16 %v327, %v326
    %v331 = vpack.c.bf16 %v329, %v328
    %v332 = vlaneseq
    %v333 = vshrl.u32 %v332, 7
    %v334 = vsub.s32 2, %v333
    %v335 = vrot.slane %v29, %v334
    %v352 = vunpack.c.l.b16 %v51
    %v353 = vunpack.c.l.b16 %v52
    %v354 = vunpack.c.l.b16 %v53
    %v355 = vunpack.c.l.b16 %v54
    %v356 = vunpack.c.l.b16 %v55
    %v357 = vunpack.c.l.b16 %v56
    %v358 = vunpack.c.l.b16 %v57
    %v359 = vunpack.c.l.b16 %v58
    %v360 = vunpack.c.l.b16 %v59
    %v361 = vunpack.c.l.b16 %v60
    %v362 = vunpack.c.l.b16 %v61
    %v363 = vunpack.c.l.b16 %v62
    %v364 = vunpack.c.l.b16 %v63
    %v365 = vunpack.c.l.b16 %v64
    %v366 = vunpack.c.l.b16 %v65
    %v367 = vunpack.c.l.b16 %v66
    %v368 = vpack.c.b16 %v353, %v352
    %v369 = vpack.c.b16 %v355, %v354
    %v370 = vpack.c.b16 %v357, %v356
    %v371 = vpack.c.b16 %v359, %v358
    %v372 = vpack.c.b16 %v361, %v360
    %v373 = vpack.c.b16 %v363, %v362
    %v374 = vpack.c.b16 %v365, %v364
    %v375 = vpack.c.b16 %v367, %v366
    %384 = vmatprep.subr.bf16.mxu0 0
    %385 = vmatpush1.bf16.msra.mxu0 %v375
    %386 = vmatprep.subr.bf16.mxu0 0
    %387 = vmatpush1.bf16.msra.mxu0 %v374
    %388 = vmatprep.subr.bf16.mxu0 0
    %389 = vmatpush1.bf16.msra.mxu0 %v373
    %390 = vmatprep.subr.bf16.mxu0 0
    %391 = vmatpush1.bf16.msra.mxu0 %v372
    %392 = vmatprep.subr.bf16.mxu0 0
    %393 = vmatpush1.bf16.msra.mxu0 %v371
    %394 = vmatprep.subr.bf16.mxu0 0
    %395 = vmatpush1.bf16.msra.mxu0 %v370
    %396 = vmatprep.subr.bf16.mxu0 0
    %397 = vmatpush1.bf16.msra.mxu0 %v369
    %398 = vmatprep.subr.bf16.mxu0 0
    %399 = vmatpush1.bf16.msra.mxu0 %v368
    %400 = vmatprep.subr.bf16.mxu0 0
    %401 = vmatpush2.bf16.msra.mxu0 0
    %402 = vmatprep.subr.bf16.mxu0 0
    %403 = vmatpush2.bf16.msra.mxu0 0
    %404 = vmatprep.subr.bf16.mxu0 0
    %405 = vmatpush2.bf16.msra.mxu0 0
    %406 = vmatprep.subr.bf16.mxu0 0
    %407 = vmatpush2.bf16.msra.mxu0 0
    %408 = vmatprep.subr.bf16.mxu0 0
    %409 = vmatpush2.bf16.msra.mxu0 0
    %410 = vmatprep.subr.bf16.mxu0 0
    %411 = vmatpush2.bf16.msra.mxu0 0
    %412 = vmatprep.subr.bf16.mxu0 0
    %413 = vmatpush2.bf16.msra.mxu0 0
    %414 = vmatprep.subr.bf16.mxu0 0
    %415 = vmatpush2.bf16.msra.mxu0 0
    %416 = vmatprep.mubr.bf16.mxu0 0
    %417 = vmatmul.mubr.bf16.gmra.mxu0 %v330
    %v418 = vpop.f32.mrf.mxu0
    %v419 = vadd.f32 %v335, %v418
    %v420 = vpop.f32.mrf.mxu0
    %v421 = vpop.f32.mrf.mxu0
    %v422 = vadd.f32 %v335, %v421
    %v423 = vpop.f32.mrf.mxu0
    %424 = vmatprep.mubr.bf16.mxu0 0
    %425 = vmatmul.mubr.bf16.gmra.mxu0 %v331
    %v426 = vpop.f32.mrf.mxu0
    %v427 = vadd.f32 %v335, %v426
    %v428 = vpop.f32.mrf.mxu0
    %v429 = vpop.f32.mrf.mxu0
    %v430 = vadd.f32 %v335, %v429
    %v431 = vpop.f32.mrf.mxu0
    %432 = vdwg.mxu0
    %v433 = vmax.f32 %v419, 0.0
    %v434 = vmax.f32 %v422, 0.0
    %v435 = vmax.f32 %v427, 0.0
    %v436 = vmax.f32 %v430, 0.0
    %v437 = vadd.f32 %v219, %v433
    %v438 = vadd.f32 %v220, %v434
    %v439 = vadd.f32 %v221, %v435
    %v440 = vadd.f32 %v222, %v436
    %v441 = vadd.f32 %v437, %v438
    %v442 = vadd.f32 %v441, %v439
    %v443 = vadd.f32 %v442, %v440
    %v444 = vrot.slane %v443, 4
    %v445 = vadd.f32 %v443, %v444
    %v446 = vrot.slane %v445, 2
    %v447 = vadd.f32 %v445, %v446
    %v448 = vrot.slane %v447, 1
    %v449 = vadd.f32 %v447, %v448
    %v450 = vmul.f32 %v437, %v437
    %v451 = vmul.f32 %v438, %v438
    %v452 = vmul.f32 %v439, %v439
    %v453 = vmul.f32 %v440, %v440
    %v454 = vadd.f32 %v450, %v451
    %v455 = vadd.f32 %v454, %v452
    %v456 = vadd.f32 %v455, %v453
    %v457 = vrot.slane %v456, 4
    %v458 = vadd.f32 %v456, %v457
    %v459 = vrot.slane %v458, 2
    %v460 = vadd.f32 %v458, %v459
    %v461 = vrot.slane %v460, 1
    %v462 = vadd.f32 %v460, %v461
    %v463 = vmul.f32 %v449, 0.03125
    %v464 = vmul.f32 %v462, 0.03125
    %v465 = vmul.f32 %v463, %v463
    %v466 = vsub.f32 %v464, %v465
    %v467 = vsub.f32 %v437, %v463
    %v468 = vsub.f32 %v438, %v463
    %v469 = vsub.f32 %v439, %v463
    %v470 = vsub.f32 %v440, %v463
    %v471 = vadd.f32 %v466, 1e-05
    %v472 = vrsqrt.pop %v471
    %v473 = vmul.f32 %v467, %v472
    %v474 = vmul.f32 %v468, %v472
    %v475 = vmul.f32 %v469, %v472
    %v476 = vmul.f32 %v470, %v472
    %v477 = vlaneseq
    %v478 = vshrl.u32 %v477, 7
    %v479 = vsub.s32 3, %v478
    %v480 = vrot.slane %v29, %v479
    %v481 = vmul.f32 %v473, %v480
    %v482 = vmul.f32 %v474, %v480
    %v483 = vmul.f32 %v475, %v480
    %v484 = vmul.f32 %v476, %v480
    %v485 = vlaneseq
    %v486 = vshrl.u32 %v485, 7
    %v487 = vsub.s32 4, %v486
    %v488 = vrot.slane %v29, %v487
    %v489 = vadd.f32 %v481, %v488
    %v490 = vadd.f32 %v482, %v488
    %v491 = vadd.f32 %v483, %v488
    %v492 = vadd.f32 %v484, %v488
    %v493 = vpack.c.bf16 %v490, %v489
    %v494 = vpack.c.bf16 %v492, %v491
    %v495 = vlaneseq
    %v496 = vshrl.u32 %v495, 7
    %v497 = vsub.s32 5, %v496
    %v498 = vrot.slane %v29, %v497
    %v499 = vlaneseq
    %v500 = vshrl.u32 %v499, 7
    %v501 = vsub.s32 5, %v500
    %v502 = vrot.slane %v30, %v501
    %v519 = vunpack.c.l.b16 %v67
    %v520 = vunpack.c.h.b16 %v67
    %v521 = vunpack.c.l.b16 %v68
    %v522 = vunpack.c.h.b16 %v68
    %v523 = vunpack.c.l.b16 %v69
    %v524 = vunpack.c.h.b16 %v69
    %v525 = vunpack.c.l.b16 %v70
    %v526 = vunpack.c.h.b16 %v70
    %v527 = vunpack.c.l.b16 %v71
    %v528 = vunpack.c.h.b16 %v71
    %v529 = vunpack.c.l.b16 %v72
    %v530 = vunpack.c.h.b16 %v72
    %v531 = vunpack.c.l.b16 %v73
    %v532 = vunpack.c.h.b16 %v73
    %v533 = vunpack.c.l.b16 %v74
    %v534 = vunpack.c.h.b16 %v74
    %v535 = vunpack.c.l.b16 %v75
    %v536 = vunpack.c.h.b16 %v75
    %v537 = vunpack.c.l.b16 %v76
    %v538 = vunpack.c.h.b16 %v76
    %v539 = vunpack.c.l.b16 %v77
    %v540 = vunpack.c.h.b16 %v77
    %v541 = vunpack.c.l.b16 %v78
    %v542 = vunpack.c.h.b16 %v78
    %v543 = vunpack.c.l.b16 %v79
    %v544 = vunpack.c.h.b16 %v79
    %v545 = vunpack.c.l.b16 %v80
    %v546 = vunpack.c.h.b16 %v80
    %v547 = vunpack.c.l.b16 %v81
    %v548 = vunpack.c.h.b16 %v81
    %v549 = vunpack.c.l.b16 %v82
    %v550 = vunpack.c.h.b16 %v82
    %v551 = vpack.c.b16 %v521, %v519
    %v552 = vpack.c.b16 %v522, %v520
    %v553 = vpack.c.b16 %v525, %v523
    %v554 = vpack.c.b16 %v526, %v524
    %v555 = vpack.c.b16 %v529, %v527
    %v556 = vpack.c.b16 %v530, %v528
    %v557 = vpack.c.b16 %v533, %v531
    %v558 = vpack.c.b16 %v534, %v532
    %v559 = vpack.c.b16 %v537, %v535
    %v560 = vpack.c.b16 %v538, %v536
    %v561 = vpack.c.b16 %v541, %v539
    %v562 = vpack.c.b16 %v542, %v540
    %v563 = vpack.c.b16 %v545, %v543
    %v564 = vpack.c.b16 %v546, %v544
    %v565 = vpack.c.b16 %v549, %v547
    %v566 = vpack.c.b16 %v550, %v548
    %583 = vmatprep.subr.bf16.mxu0 %v566
    %584 = vmatpush1.bf16.msra.mxu0 %v565
    %585 = vmatprep.subr.bf16.mxu0 %v564
    %586 = vmatpush1.bf16.msra.mxu0 %v563
    %587 = vmatprep.subr.bf16.mxu0 %v562
    %588 = vmatpush1.bf16.msra.mxu0 %v561
    %589 = vmatprep.subr.bf16.mxu0 %v560
    %590 = vmatpush1.bf16.msra.mxu0 %v559
    %591 = vmatprep.subr.bf16.mxu0 %v558
    %592 = vmatpush1.bf16.msra.mxu0 %v557
    %593 = vmatprep.subr.bf16.mxu0 %v556
    %594 = vmatpush1.bf16.msra.mxu0 %v555
    %595 = vmatprep.subr.bf16.mxu0 %v554
    %596 = vmatpush1.bf16.msra.mxu0 %v553
    %597 = vmatprep.subr.bf16.mxu0 %v552
    %598 = vmatpush1.bf16.msra.mxu0 %v551
    %599 = vmatprep.subr.bf16.mxu0 0
    %600 = vmatpush2.bf16.msra.mxu0 0
    %601 = vmatprep.subr.bf16.mxu0 0
    %602 = vmatpush2.bf16.msra.mxu0 0
    %603 = vmatprep.subr.bf16.mxu0 0
    %604 = vmatpush2.bf16.msra.mxu0 0
    %605 = vmatprep.subr.bf16.mxu0 0
    %606 = vmatpush2.bf16.msra.mxu0 0
    %607 = vmatprep.subr.bf16.mxu0 0
    %608 = vmatpush2.bf16.msra.mxu0 0
    %609 = vmatprep.subr.bf16.mxu0 0
    %610 = vmatpush2.bf16.msra.mxu0 0
    %611 = vmatprep.subr.bf16.mxu0 0
    %612 = vmatpush2.bf16.msra.mxu0 0
    %613 = vmatprep.subr.bf16.mxu0 0
    %614 = vmatpush2.bf16.msra.mxu0 0
    %615 = vmatprep.mubr.bf16.mxu0 0
    %616 = vmatmul.mubr.bf16.gmra.mxu0 %v493
    %v617 = vpop.f32.mrf.mxu0
    %v618 = vadd.f32 %v498, %v617
    %v619 = vpop.f32.mrf.mxu0
    %v620 = vadd.f32 %v502, %v619
    %v621 = vpop.f32.mrf.mxu0
    %v622 = vadd.f32 %v498, %v621
    %v623 = vpop.f32.mrf.mxu0
    %v624 = vadd.f32 %v502, %v623
    %625 = vmatprep.mubr.bf16.mxu0 0
    %626 = vmatmul.mubr.bf16.gmra.mxu0 %v494
    %v627 = vpop.f32.mrf.mxu0
    %v628 = vadd.f32 %v498, %v627
    %v629 = vpop.f32.mrf.mxu0
    %v630 = vadd.f32 %v502, %v629
    %v631 = vpop.f32.mrf.mxu0
    %v632 = vadd.f32 %v498, %v631
    %v633 = vpop.f32.mrf.mxu0
    %v634 = vadd.f32 %v502, %v633
    %635 = vdwg.mxu0
    %v636 = vmax.f32 %v618, 0.0
    %v637 = vmax.f32 %v620, 0.0
    %v638 = vmax.f32 %v622, 0.0
    %v639 = vmax.f32 %v624, 0.0
    %v640 = vmax.f32 %v628, 0.0
    %v641 = vmax.f32 %v630, 0.0
    %v642 = vmax.f32 %v632, 0.0
    %v643 = vmax.f32 %v634, 0.0
    %v644 = vpack.c.bf16 %v638, %v636
    %v645 = vpack.c.bf16 %v639, %v637
    %v646 = vpack.c.bf16 %v642, %v640
    %v647 = vpack.c.bf16 %v643, %v641
    %v648 = vlaneseq
    %v649 = vshrl.u32 %v648, 7
    %v650 = vsub.s32 6, %v649
    %v651 = vrot.slane %v29, %v650
    %v652 = vlaneseq
    %v653 = vshrl.u32 %v652, 7
    %v654 = vsub.s32 6, %v653
    %v655 = vrot.slane %v30, %v654
    %v688 = vunpack.c.l.b16 %v83
    %v689 = vunpack.c.h.b16 %v83
    %v690 = vunpack.c.l.b16 %v84
    %v691 = vunpack.c.h.b16 %v84
    %v692 = vunpack.c.l.b16 %v85
    %v693 = vunpack.c.h.b16 %v85
    %v694 = vunpack.c.l.b16 %v86
    %v695 = vunpack.c.h.b16 %v86
    %v696 = vunpack.c.l.b16 %v87
    %v697 = vunpack.c.h.b16 %v87
    %v698 = vunpack.c.l.b16 %v88
    %v699 = vunpack.c.h.b16 %v88
    %v700 = vunpack.c.l.b16 %v89
    %v701 = vunpack.c.h.b16 %v89
    %v702 = vunpack.c.l.b16 %v90
    %v703 = vunpack.c.h.b16 %v90
    %v704 = vunpack.c.l.b16 %v91
    %v705 = vunpack.c.h.b16 %v91
    %v706 = vunpack.c.l.b16 %v92
    %v707 = vunpack.c.h.b16 %v92
    %v708 = vunpack.c.l.b16 %v93
    %v709 = vunpack.c.h.b16 %v93
    %v710 = vunpack.c.l.b16 %v94
    %v711 = vunpack.c.h.b16 %v94
    %v712 = vunpack.c.l.b16 %v95
    %v713 = vunpack.c.h.b16 %v95
    %v714 = vunpack.c.l.b16 %v96
    %v715 = vunpack.c.h.b16 %v96
    %v716 = vunpack.c.l.b16 %v97
    %v717 = vunpack.c.h.b16 %v97
    %v718 = vunpack.c.l.b16 %v98
    %v719 = vunpack.c.h.b16 %v98
    %v720 = vunpack.c.l.b16 %v99
    %v721 = vunpack.c.h.b16 %v99
    %v722 = vunpack.c.l.b16 %v100
    %v723 = vunpack.c.h.b16 %v100
    %v724 = vunpack.c.l.b16 %v101
    %v725 = vunpack.c.h.b16 %v101
    %v726 = vunpack.c.l.b16 %v102
    %v727 = vunpack.c.h.b16 %v102
    %v728 = vunpack.c.l.b16 %v103
    %v729 = vunpack.c.h.b16 %v103
    %v730 = vunpack.c.l.b16 %v104
    %v731 = vunpack.c.h.b16 %v104
    %v732 = vunpack.c.l.b16 %v105
    %v733 = vunpack.c.h.b16 %v105
    %v734 = vunpack.c.l.b16 %v106
    %v735 = vunpack.c.h.b16 %v106
    %v736 = vunpack.c.l.b16 %v107
    %v737 = vunpack.c.h.b16 %v107
    %v738 = vunpack.c.l.b16 %v108
    %v739 = vunpack.c.h.b16 %v108
    %v740 = vunpack.c.l.b16 %v109
    %v741 = vunpack.c.h.b16 %v109
    %v742 = vunpack.c.l.b16 %v110
    %v743 = vunpack.c.h.b16 %v110
    %v744 = vunpack.c.l.b16 %v111
    %v745 = vunpack.c.h.b16 %v111
    %v746 = vunpack.c.l.b16 %v112
    %v747 = vunpack.c.h.b16 %v112
    %v748 = vunpack.c.l.b16 %v113
    %v749 = vunpack.c.h.b16 %v113
    %v750 = vunpack.c.l.b16 %v114
    %v751 = vunpack.c.h.b16 %v114
    %v752 = vpack.c.b16 %v690, %v688
    %v753 = vpack.c.b16 %v691, %v689
    %v754 = vpack.c.b16 %v694, %v692
    %v755 = vpack.c.b16 %v695, %v693
    %v756 = vpack.c.b16 %v698, %v696
    %v757 = vpack.c.b16 %v699, %v697
    %v758 = vpack.c.b16 %v702, %v700
    %v759 = vpack.c.b16 %v703, %v701
    %v760 = vpack.c.b16 %v706, %v704
    %v761 = vpack.c.b16 %v707, %v705
    %v762 = vpack.c.b16 %v710, %v708
    %v763 = vpack.c.b16 %v711, %v709
    %v764 = vpack.c.b16 %v714, %v712
    %v765 = vpack.c.b16 %v715, %v713
    %v766 = vpack.c.b16 %v718, %v716
    %v767 = vpack.c.b16 %v719, %v717
    %v768 = vpack.c.b16 %v722, %v720
    %v769 = vpack.c.b16 %v723, %v721
    %v770 = vpack.c.b16 %v726, %v724
    %v771 = vpack.c.b16 %v727, %v725
    %v772 = vpack.c.b16 %v730, %v728
    %v773 = vpack.c.b16 %v731, %v729
    %v774 = vpack.c.b16 %v734, %v732
    %v775 = vpack.c.b16 %v735, %v733
    %v776 = vpack.c.b16 %v738, %v736
    %v777 = vpack.c.b16 %v739, %v737
    %v778 = vpack.c.b16 %v742, %v740
    %v779 = vpack.c.b16 %v743, %v741
    %v780 = vpack.c.b16 %v746, %v744
    %v781 = vpack.c.b16 %v747, %v745
    %v782 = vpack.c.b16 %v750, %v748
    %v783 = vpack.c.b16 %v751, %v749
    %816 = vmatprep.subr.bf16.mxu0 %v767
    %817 = vmatpush1.bf16.msra.mxu0 %v766
    %818 = vmatprep.subr.bf16.mxu0 %v765
    %819 = vmatpush1.bf16.msra.mxu0 %v764
    %820 = vmatprep.subr.bf16.mxu0 %v763
    %821 = vmatpush1.bf16.msra.mxu0 %v762
    %822 = vmatprep.subr.bf16.mxu0 %v761
    %823 = vmatpush1.bf16.msra.mxu0 %v760
    %824 = vmatprep.subr.bf16.mxu0 %v759
    %825 = vmatpush1.bf16.msra.mxu0 %v758
    %826 = vmatprep.subr.bf16.mxu0 %v757
    %827 = vmatpush1.bf16.msra.mxu0 %v756
    %828 = vmatprep.subr.bf16.mxu0 %v755
    %829 = vmatpush1.bf16.msra.mxu0 %v754
    %830 = vmatprep.subr.bf16.mxu0 %v753
    %831 = vmatpush1.bf16.msra.mxu0 %v752
    %832 = vmatprep.subr.bf16.mxu0 %v783
    %833 = vmatpush2.bf16.msra.mxu0 %v782
    %834 = vmatprep.subr.bf16.mxu0 %v781
    %835 = vmatpush2.bf16.msra.mxu0 %v780
    %836 = vmatprep.subr.bf16.mxu0 %v779
    %837 = vmatpush2.bf16.msra.mxu0 %v778
    %838 = vmatprep.subr.bf16.mxu0 %v777
    %839 = vmatpush2.bf16.msra.mxu0 %v776
    %840 = vmatprep.subr.bf16.mxu0 %v775
    %841 = vmatpush2.bf16.msra.mxu0 %v774
    %842 = vmatprep.subr.bf16.mxu0 %v773
    %843 = vmatpush2.bf16.msra.mxu0 %v772
    %844 = vmatprep.subr.bf16.mxu0 %v771
    %845 = vmatpush2.bf16.msra.mxu0 %v770
    %846 = vmatprep.subr.bf16.mxu0 %v769
    %847 = vmatpush2.bf16.msra.mxu0 %v768
    %848 = vmatprep.mubr.bf16.mxu0 %v645
    %849 = vmatmul.mubr.bf16.gmra.mxu0 %v644
    %v850 = vpop.f32.mrf.mxu0
    %v851 = vadd.f32 %v651, %v850
    %v852 = vpop.f32.mrf.mxu0
    %v853 = vadd.f32 %v655, %v852
    %v854 = vpop.f32.mrf.mxu0
    %v855 = vadd.f32 %v651, %v854
    %v856 = vpop.f32.mrf.mxu0
    %v857 = vadd.f32 %v655, %v856
    %858 = vmatprep.mubr.bf16.mxu0 %v647
    %859 = vmatmul.mubr.bf16.gmra.mxu0 %v646
    %v860 = vpop.f32.mrf.mxu0
    %v861 = vadd.f32 %v651, %v860
    %v862 = vpop.f32.mrf.mxu0
    %v863 = vadd.f32 %v655, %v862
    %v864 = vpop.f32.mrf.mxu0
    %v865 = vadd.f32 %v651, %v864
    %v866 = vpop.f32.mrf.mxu0
    %v867 = vadd.f32 %v655, %v866
    %868 = vdwg.mxu0
    %v869 = vmax.f32 %v851, 0.0
    %v870 = vmax.f32 %v853, 0.0
    %v871 = vmax.f32 %v855, 0.0
    %v872 = vmax.f32 %v857, 0.0
    %v873 = vmax.f32 %v861, 0.0
    %v874 = vmax.f32 %v863, 0.0
    %v875 = vmax.f32 %v865, 0.0
    %v876 = vmax.f32 %v867, 0.0
    %v877 = vadd.f32 %v489, %v869
    %v878 = vadd.f32 %v489, %v870
    %v879 = vadd.f32 %v490, %v871
    %v880 = vadd.f32 %v490, %v872
    %v881 = vadd.f32 %v491, %v873
    %v882 = vadd.f32 %v491, %v874
    %v883 = vadd.f32 %v492, %v875
    %v884 = vadd.f32 %v492, %v876
    %v885 = vadd.f32 %v877, %v879
    %v886 = vadd.f32 %v885, %v881
    %v887 = vadd.f32 %v886, %v883
    %v888 = vrot.slane %v887, 4
    %v889 = vadd.f32 %v887, %v888
    %v890 = vrot.slane %v889, 2
    %v891 = vadd.f32 %v889, %v890
    %v892 = vrot.slane %v891, 1
    %v893 = vadd.f32 %v891, %v892
    %v894 = vadd.f32 %v878, %v880
    %v895 = vadd.f32 %v894, %v882
    %v896 = vadd.f32 %v895, %v884
    %v897 = vrot.slane %v896, 4
    %v898 = vadd.f32 %v896, %v897
    %v899 = vrot.slane %v898, 2
    %v900 = vadd.f32 %v898, %v899
    %v901 = vrot.slane %v900, 1
    %v902 = vadd.f32 %v900, %v901
    %v903 = vmul.f32 %v877, %v877
    %v904 = vmul.f32 %v878, %v878
    %v905 = vmul.f32 %v879, %v879
    %v906 = vmul.f32 %v880, %v880
    %v907 = vmul.f32 %v881, %v881
    %v908 = vmul.f32 %v882, %v882
    %v909 = vmul.f32 %v883, %v883
    %v910 = vmul.f32 %v884, %v884
    %v911 = vadd.f32 %v903, %v905
    %v912 = vadd.f32 %v911, %v907
    %v913 = vadd.f32 %v912, %v909
    %v914 = vrot.slane %v913, 4
    %v915 = vadd.f32 %v913, %v914
    %v916 = vrot.slane %v915, 2
    %v917 = vadd.f32 %v915, %v916
    %v918 = vrot.slane %v917, 1
    %v919 = vadd.f32 %v917, %v918
    %v920 = vadd.f32 %v904, %v906
    %v921 = vadd.f32 %v920, %v908
    %v922 = vadd.f32 %v921, %v910
    %v923 = vrot.slane %v922, 4
    %v924 = vadd.f32 %v922, %v923
    %v925 = vrot.slane %v924, 2
    %v926 = vadd.f32 %v924, %v925
    %v927 = vrot.slane %v926, 1
    %v928 = vadd.f32 %v926, %v927
    %v929 = vmul.f32 %v893, 0.03125
    %v930 = vmul.f32 %v902, 0.03125
    %v931 = vmul.f32 %v919, 0.03125
    %v932 = vmul.f32 %v928, 0.03125
    %v933 = vmul.f32 %v929, %v929
    %v934 = vmul.f32 %v930, %v930
    %v935 = vsub.f32 %v931, %v933
    %v936 = vsub.f32 %v932, %v934
    %v937 = vsub.f32 %v877, %v929
    %v938 = vsub.f32 %v878, %v930
    %v939 = vsub.f32 %v879, %v929
    %v940 = vsub.f32 %v880, %v930
    %v941 = vsub.f32 %v881, %v929
    %v942 = vsub.f32 %v882, %v930
    %v943 = vsub.f32 %v883, %v929
    %v944 = vsub.f32 %v884, %v930
    %v945 = vadd.f32 %v935, 1e-05
    %v946 = vadd.f32 %v936, 1e-05
    %v947 = vrsqrt.pop %v945
    %v948 = vrsqrt.pop %v946
    %v949 = vmul.f32 %v937, %v947
    %v950 = vmul.f32 %v938, %v948
    %v951 = vmul.f32 %v939, %v947
    %v952 = vmul.f32 %v940, %v948
    %v953 = vmul.f32 %v941, %v947
    %v954 = vmul.f32 %v942, %v948
    %v955 = vmul.f32 %v943, %v947
    %v956 = vmul.f32 %v944, %v948
    %v957 = vlaneseq
    %v958 = vshrl.u32 %v957, 7
    %v959 = vsub.s32 7, %v958
    %v960 = vrot.slane %v29, %v959
    %v961 = vlaneseq
    %v962 = vshrl.u32 %v961, 7
    %v963 = vsub.s32 7, %v962
    %v964 = vrot.slane %v30, %v963
    %v965 = vmul.f32 %v949, %v960
    %v966 = vmul.f32 %v950, %v964
    %v967 = vmul.f32 %v951, %v960
    %v968 = vmul.f32 %v952, %v964
    %v969 = vmul.f32 %v953, %v960
    %v970 = vmul.f32 %v954, %v964
    %v971 = vmul.f32 %v955, %v960
    %v972 = vmul.f32 %v956, %v964
    %v973 = vlaneseq
    %v974 = vshrl.u32 %v973, 7
    %v975 = vsub.s32 0, %v974
    %v976 = vrot.slane %v31, %v975
    %v977 = vlaneseq
    %v978 = vshrl.u32 %v977, 7
    %v979 = vsub.s32 0, %v978
    %v980 = vrot.slane %v32, %v979
    %v981 = vadd.f32 %v965, %v976
    %v982 = vadd.f32 %v966, %v980
    %v983 = vadd.f32 %v967, %v976
    %v984 = vadd.f32 %v968, %v980
    %v985 = vadd.f32 %v969, %v976
    %v986 = vadd.f32 %v970, %v980
    %v987 = vadd.f32 %v971, %v976
    %v988 = vadd.f32 %v972, %v980
    %v989 = vpack.c.bf16 %v983, %v981
    %v990 = vpack.c.bf16 %v984, %v982
    %v991 = vpack.c.bf16 %v987, %v985
    %v992 = vpack.c.bf16 %v988, %v986
    %v993 = vlaneseq
    %v994 = vshrl.u32 %v993, 7
    %v995 = vsub.s32 1, %v994
    %v996 = vrot.slane %v31, %v995
    %v1029 = vunpack.c.l.b16 %v115
    %v1030 = vunpack.c.l.b16 %v116
    %v1031 = vunpack.c.l.b16 %v117
    %v1032 = vunpack.c.l.b16 %v118
    %v1033 = vunpack.c.l.b16 %v119
    %v1034 = vunpack.c.l.b16 %v120
    %v1035 = vunpack.c.l.b16 %v121
    %v1036 = vunpack.c.l.b16 %v122
    %v1037 = vunpack.c.l.b16 %v123
    %v1038 = vunpack.c.l.b16 %v124
    %v1039 = vunpack.c.l.b16 %v125
    %v1040 = vunpack.c.l.b16 %v126
    %v1041 = vunpack.c.l.b16 %v127
    %v1042 = vunpack.c.l.b16 %v128
    %v1043 = vunpack.c.l.b16 %v129
    %v1044 = vunpack.c.l.b16 %v130
    %v1045 = vunpack.c.l.b16 %v131
    %v1046 = vunpack.c.l.b16 %v132
    %v1047 = vunpack.c.l.b16 %v133
    %v1048 = vunpack.c.l.b16 %v134
    %v1049 = vunpack.c.l.b16 %v135
    %v1050 = vunpack.c.l.b16 %v136
    %v1051 = vunpack.c.l.b16 %v137
    %v1052 = vunpack.c.l.b16 %v138
    %v1053 = vunpack.c.l.b16 %v139
    %v1054 = vunpack.c.l.b16 %v140
    %v1055 = vunpack.c.l.b16 %v141
    %v1056 = vunpack.c.l.b16 %v142
    %v1057 = vunpack.c.l.b16 %v143
    %v1058 = vunpack.c.l.b16 %v144
    %v1059 = vunpack.c.l.b16 %v145
    %v1060 = vunpack.c.l.b16 %v146
    %v1061 = vpack.c.b16 %v1030, %v1029
    %v1062 = vpack.c.b16 %v1032, %v1031
    %v1063 = vpack.c.b16 %v1034, %v1033
    %v1064 = vpack.c.b16 %v1036, %v1035
    %v1065 = vpack.c.b16 %v1038, %v1037
    %v1066 = vpack.c.b16 %v1040, %v1039
    %v1067 = vpack.c.b16 %v1042, %v1041
    %v1068 = vpack.c.b16 %v1044, %v1043
    %v1069 = vpack.c.b16 %v1046, %v1045
    %v1070 = vpack.c.b16 %v1048, %v1047
    %v1071 = vpack.c.b16 %v1050, %v1049
    %v1072 = vpack.c.b16 %v1052, %v1051
    %v1073 = vpack.c.b16 %v1054, %v1053
    %v1074 = vpack.c.b16 %v1056, %v1055
    %v1075 = vpack.c.b16 %v1058, %v1057
    %v1076 = vpack.c.b16 %v1060, %v1059
    %1093 = vmatprep.subr.bf16.mxu0 0
    %1094 = vmatpush1.bf16.msra.mxu0 %v1068
    %1095 = vmatprep.subr.bf16.mxu0 0
    %1096 = vmatpush1.bf16.msra.mxu0 %v1067
    %1097 = vmatprep.subr.bf16.mxu0 0
    %1098 = vmatpush1.bf16.msra.mxu0 %v1066
    %1099 = vmatprep.subr.bf16.mxu0 0
    %1100 = vmatpush1.bf16.msra.mxu0 %v1065
    %1101 = vmatprep.subr.bf16.mxu0 0
    %1102 = vmatpush1.bf16.msra.mxu0 %v1064
    %1103 = vmatprep.subr.bf16.mxu0 0
    %1104 = vmatpush1.bf16.msra.mxu0 %v1063
    %1105 = vmatprep.subr.bf16.mxu0 0
    %1106 = vmatpush1.bf16.msra.mxu0 %v1062
    %1107 = vmatprep.subr.bf16.mxu0 0
    %1108 = vmatpush1.bf16.msra.mxu0 %v1061
    %1109 = vmatprep.subr.bf16.mxu0 0
    %1110 = vmatpush2.bf16.msra.mxu0 %v1076
    %1111 = vmatprep.subr.bf16.mxu0 0
    %1112 = vmatpush2.bf16.msra.mxu0 %v1075
    %1113 = vmatprep.subr.bf16.mxu0 0
    %1114 = vmatpush2.bf16.msra.mxu0 %v1074
    %1115 = vmatprep.subr.bf16.mxu0 0
    %1116 = vmatpush2.bf16.msra.mxu0 %v1073
    %1117 = vmatprep.subr.bf16.mxu0 0
    %1118 = vmatpush2.bf16.msra.mxu0 %v1072
    %1119 = vmatprep.subr.bf16.mxu0 0
    %1120 = vmatpush2.bf16.msra.mxu0 %v1071
    %1121 = vmatprep.subr.bf16.mxu0 0
    %1122 = vmatpush2.bf16.msra.mxu0 %v1070
    %1123 = vmatprep.subr.bf16.mxu0 0
    %1124 = vmatpush2.bf16.msra.mxu0 %v1069
    %1125 = vmatprep.mubr.bf16.mxu0 %v990
    %1126 = vmatmul.mubr.bf16.gmra.mxu0 %v989
    %v1127 = vpop.f32.mrf.mxu0
    %v1128 = vadd.f32 %v996, %v1127
    %v1129 = vpop.f32.mrf.mxu0
    %v1130 = vpop.f32.mrf.mxu0
    %v1131 = vadd.f32 %v996, %v1130
    %v1132 = vpop.f32.mrf.mxu0
    %1133 = vmatprep.mubr.bf16.mxu0 %v992
    %1134 = vmatmul.mubr.bf16.gmra.mxu0 %v991
    %v1135 = vpop.f32.mrf.mxu0
    %v1136 = vadd.f32 %v996, %v1135
    %v1137 = vpop.f32.mrf.mxu0
    %v1138 = vpop.f32.mrf.mxu0
    %v1139 = vadd.f32 %v996, %v1138
    %v1140 = vpop.f32.mrf.mxu0
    %1141 = vdwg.mxu0
    %1142 = vst [vmem:[%s3] sm:$0xff] %v1128
    %1143 = vst [vmem:[%s3 + $0x8] sm:$0xff] %v1131
    %1144 = vst [vmem:[%s3 + $0x10] sm:$0xff] %v1136
    %1145 = vst [vmem:[%s3 + $0x18] sm:$0xff] %v1139
    // Predicated region
    $region18: #{forward.1} parent=1 // pred_check
      _
    $region19: #{forward.1} parent=1 // pred_check_branch
      %1147 = sbr.rel (0) target = $region21
    $region20: #{forward.1} parent=1 // pred_region
      _
    $region21: #{forward.1} parent=1 // pred_fallthru
      _
    // Predicated region
    $region22: #{forward.1} parent=1 // pred_check
      _
    $region23: #{forward.1} parent=1 // pred_check_branch
      %1149 = sbr.rel (0) target = $region25
    $region24: #{forward.1} parent=1 // pred_region
      _
    $region25: #{forward.1} parent=1 // pred_fallthru
      _
    %1150 = vsyncpa [#allocation3], 1

</llo_original>
